<compile_context>
chip_gen: v6e
topology: v6e:2x2x1
jax: 0.10.0
libtpu: 0.0.40
codegen_flags: <defaults>
</compile_context>

<pallas_src>
import numpy as np
import jax
import jax.numpy as jnp
from jax import lax
from jax.experimental import pallas as pl
from jax.experimental.pallas import tpu as pltpu


# ----------------------------------------------------------------------------
# Deterministic JPEG constants (exactly what DiffJPEG's submodules build in
# __init__ — note the .T on the quantization tables, as in the reference code).
# ----------------------------------------------------------------------------
_Y_TABLE = np.array(
    [[16, 11, 10, 16, 24, 40, 51, 61],
     [12, 12, 14, 19, 26, 58, 60, 55],
     [14, 13, 16, 24, 40, 57, 69, 56],
     [14, 17, 22, 29, 51, 87, 80, 62],
     [18, 22, 37, 56, 68, 109, 103, 77],
     [24, 35, 55, 64, 81, 104, 113, 92],
     [49, 64, 78, 87, 103, 121, 120, 101],
     [72, 92, 95, 98, 112, 100, 103, 99]], dtype=np.float32).T

_C_TABLE = np.full((8, 8), 99.0, dtype=np.float32)
_C_TABLE[:4, :4] = np.array([[17, 18, 24, 47],
                             [18, 21, 26, 66],
                             [24, 26, 56, 99],
                             [47, 66, 99, 99]], dtype=np.float32).T

# RGB <-> YCbCr (JPEG) matrices, stored transposed as in the torch modules.
_RGB2YCBCR_M = np.array([[0.299, 0.587, 0.114],
                         [-0.168736, -0.331264, 0.5],
                         [0.5, -0.418688, -0.081312]], dtype=np.float32).T
_RGB2YCBCR_SHIFT = np.array([0.0, 128.0, 128.0], dtype=np.float32)

_YCBCR2RGB_M = np.array([[1.0, 0.0, 1.402],
                         [1.0, -0.344136, -0.714136],
                         [1.0, 1.772, 0.0]], dtype=np.float32).T
_YCBCR2RGB_SHIFT = np.array([0.0, -128.0, -128.0], dtype=np.float32)


def _make_dct_constants():
    """(64,64) DCT / IDCT basis matrices and per-coefficient scale vectors."""
    xs = np.arange(8)
    # DCT:  T[x, y, u, v] = cos((2x+1)u*pi/16) * cos((2y+1)v*pi/16)
    cxu = np.cos((2 * xs[:, None] + 1) * xs[None, :] * np.pi / 16.0)   # [x, u]
    dct = np.einsum('xu,yv->xyuv', cxu, cxu).astype(np.float32)        # [x,y,u,v]
    alpha1 = np.array([1.0 / np.sqrt(2)] + [1.0] * 7, dtype=np.float32)
    dct_scale = (np.outer(alpha1, alpha1) * 0.25).astype(np.float32)   # [u, v]
    # IDCT: T[f1, f2, s1, s2] = cos((2s1+1)f1*pi/16) * cos((2s2+1)f2*pi/16)
    cux = np.cos((2 * xs[None, :] + 1) * xs[:, None] * np.pi / 16.0)   # [freq, spatial]
    idct = np.einsum('xu,yv->xyuv', cux, cux).astype(np.float32)
    idct_alpha = np.outer(alpha1, alpha1).astype(np.float32)           # [f1, f2]
    return (dct.reshape(64, 64), dct_scale.reshape(64),
            idct.reshape(64, 64), idct_alpha.reshape(64))


_DCT_MAT, _DCT_SCALE, _IDCT_MAT, _IDCT_ALPHA = _make_dct_constants()

_TILE_BYTES = 2 * 1024 * 1024      # f32 bytes per data-block buffer (in / out)
_MIN_GRID = 4                      # target >= 4 grid steps (v7x megacore balance)
_VMEM_LIMIT = 48 * 1024 * 1024     # headroom for kernel temporaries (<64 MiB phys)

_PACK_CACHE = None


def _mxu_pack():
    """8x8 blocks packed per kernel row: 4 (256 lanes) on 256-wide MXUs
    (v6e / v7x), 2 (128 lanes) on v5e and older 128-wide MXUs."""
    global _PACK_CACHE
    if _PACK_CACHE is None:
        pack = 2
        try:
            kind = jax.devices()[0].device_kind.lower()
            if any(tag in kind for tag in ("v6", "v7", "trillium")):
                pack = 4
        except Exception:
            pack = 2
        _PACK_CACHE = pack
    return _PACK_CACHE


def _block_diag(m, n):
    out = np.zeros((64 * n, 64 * n), dtype=np.float32)
    for i in range(n):
        out[64 * i:64 * (i + 1), 64 * i:64 * (i + 1)] = m
    return out


def quality_to_factor(quality):
    # NOTE: `quality` must be a static Python number (Python `if`), as in the
    # reference module's __init__.
    if quality < 50:
        q = 5000.0 / quality
    else:
        q = 200.0 - quality * 2.0
    # Clamp: the reference returns 0 at quality=100, which divides the quant
    # table by zero (NaN/inf output).  A tiny factor ~= lossless instead.
    return max(q / 100.0, 1.0 / 255.0)


def _quant_vectors(table, factor):
    """Fold quant table, DCT scale and IDCT alpha into two 64-vectors."""
    qt = table.reshape(64).astype(np.float32) * np.float32(factor)
    inv_qs = _DCT_SCALE / qt                      # applied after forward DCT
    deq = qt * _IDCT_ALPHA * np.float32(0.25)     # applied before inverse DCT
    return inv_qs, deq


def _stacked_consts(factor, pack):
    """One (8, LANES) f32 operand: rows = [y_iq, y_dq, c_iq, c_dq, 0...]."""
    lanes = 64 * pack
    y_iq, y_dq = _quant_vectors(_Y_TABLE, factor)
    c_iq, c_dq = _quant_vectors(_C_TABLE, factor)
    consts = np.zeros((8, lanes), dtype=np.float32)
    consts[0] = np.tile(y_iq, pack)
    consts[1] = np.tile(y_dq, pack)
    consts[2] = np.tile(c_iq, pack)
    consts[3] = np.tile(c_dq, pack)
    return consts


# ----------------------------------------------------------------------------
# Pallas kernel: per-8x8-block JPEG round trip on a lane-dense packed layout.
#   blk    : (TILE, LANES)   `pack` spatial 8x8 blocks per row (row-major)
#   dct    : (LANES, LANES)  block-diagonal forward DCT basis (bf16)
#   idct   : (LANES, LANES)  block-diagonal inverse DCT basis (bf16)
#   consts : (8, LANES)      rows: y_iq, y_dq, c_iq, c_dq (f32)
# ----------------------------------------------------------------------------
def _make_jpeg_kernel(n_y_rows, tile_rows, lanes):
    def kernel(blk_ref, dct_ref, idct_ref, consts_ref, out_ref):
        # Per-row luma / chroma quant constants (VPU select, hidden under MXU).
        row0 = pl.program_id(0) * tile_rows
        rows = lax.broadcasted_iota(jnp.int32, (tile_rows, lanes), 0) + row0
        is_chroma = rows >= n_y_rows
        consts = consts_ref[...]
        inv_qs = jnp.where(is_chroma, consts[2:3, :], consts[0:1, :])
        deq = jnp.where(is_chroma, consts[3:4, :], consts[1:2, :])

        x = (blk_ref[...] - 128.0).astype(jnp.bfloat16)
        # forward DCT (bf16 MXU, f32 accumulate) fused with quantization scale
        d = jnp.dot(x, dct_ref[...], preferred_element_type=jnp.float32) * inv_qs
        # differentiable rounding: round(v) + (v - round(v))**3
        r = jnp.round(d)
        q = ((r + (d - r) ** 3) * deq).astype(jnp.bfloat16)
        # inverse DCT (bf16 MXU, f32 accumulate) + level shift
        out_ref[...] = jnp.dot(q, idct_ref[...],
                               preferred_element_type=jnp.float32) + 128.0
    return kernel


def _round_up(x, m):
    return ((x + m - 1) // m) * m


def _pack_rows(blocks64, pack):
    """(NB, 64) -> (ceil(NB/pack), 64*pack).  Returns packed array and NB."""
    nb = blocks64.shape[0]
    pad = (-nb) % pack
    if pad:
        blocks64 = jnp.pad(blocks64, ((0, pad), (0, 0)))
    return blocks64.reshape(-1, 64 * pack), nb


def _jpeg_core_fused(y_blocks, c_blocks, factor):
    """Single pallas_call over luma + chroma blocks.

    y_blocks: (NBY, 64) luma blocks, c_blocks: (NBC, 64) chroma blocks
    (Cb and Cr concatenated).  Returns the reconstructed blocks, same shapes.
    """
    pack = _mxu_pack()
    lanes = 64 * pack

    y_packed, nby = _pack_rows(y_blocks, pack)
    c_packed, nbc = _pack_rows(c_blocks, pack)
    nry, nrc = y_packed.shape[0], c_packed.shape[0]
    total = nry + nrc

    # Tile sizing: <= _TILE_BYTES per data buffer, >= _MIN_GRID grid steps for
    # megacore balance, sublane-aligned.  (Luma/chroma boundary handled per-row
    # inside the kernel, so no per-section padding.)
    max_rows = max(8, (_TILE_BYTES // (lanes * 4)) // 8 * 8)
    tile = min(max_rows, max(8, _round_up(-(-total // _MIN_GRID), 8)))
    total_pad = _round_up(total, tile)
    n_tiles = total_pad // tile

    blocks = jnp.concatenate([y_packed, c_packed], axis=0)
    if total_pad != total:
        blocks = jnp.pad(blocks, ((0, total_pad - total), (0, 0)))

    consts = _stacked_consts(factor, pack)
    dct_bd = _block_diag(_DCT_MAT, pack)
    idct_bd = _block_diag(_IDCT_MAT, pack)

    flops = 2 * 2 * total_pad * lanes * lanes            # two matmuls
    bytes_accessed = (total_pad * lanes * 4 * 2          # blocks in + out (f32)
                      + 2 * lanes * lanes * 2            # bf16 DCT / IDCT bases
                      + 8 * lanes * 4)                   # stacked quant constants

    out = pl.pallas_call(
        _make_jpeg_kernel(nry, tile, lanes),
        out_shape=jax.ShapeDtypeStruct((total_pad, lanes), jnp.float32),
        grid_spec=pltpu.PrefetchScalarGridSpec(
            num_scalar_prefetch=0,
            grid=(n_tiles,),
            in_specs=[
                pl.BlockSpec((tile, lanes), lambda i: (i, 0)),
                pl.BlockSpec((lanes, lanes), lambda i: (0, 0)),
                pl.BlockSpec((lanes, lanes), lambda i: (0, 0)),
                pl.BlockSpec((8, lanes), lambda i: (0, 0)),
            ],
            out_specs=pl.BlockSpec((tile, lanes), lambda i: (i, 0)),
        ),
        compiler_params=pltpu.CompilerParams(
            dimension_semantics=("parallel",),
            vmem_limit_bytes=_VMEM_LIMIT),
        cost_estimate=pl.CostEstimate(flops=flops, transcendentals=0,
                                      bytes_accessed=bytes_accessed),
    )(blocks,
      jnp.asarray(dct_bd, dtype=jnp.bfloat16),
      jnp.asarray(idct_bd, dtype=jnp.bfloat16),
      jnp.asarray(consts))

    y_rec = out[:nry].reshape(-1, 64)[:nby]
    c_rec = out[nry:nry + nrc].reshape(-1, 64)[:nbc]
    return y_rec, c_rec


# ----------------------------------------------------------------------------
# Glue (plain JAX): color conversion, chroma sub/up-sampling, block split/merge
# ----------------------------------------------------------------------------
def _block_split(im):
    # im: (B, H, W) -> (B * H/8 * W/8, 64), same ordering as torch block_splitting
    b, h, w = im.shape
    x = im.reshape(b, h // 8, 8, w // 8, 8)
    x = jnp.transpose(x, (0, 1, 3, 2, 4))      # (B, H/8, W/8, 8, 8)
    return x.reshape(b * (h // 8) * (w // 8), 64)


def _block_merge(flat, b, h, w):
    x = flat.reshape(b, h // 8, w // 8, 8, 8)
    x = jnp.transpose(x, (0, 1, 3, 2, 4))
    return x.reshape(b, h, w)


def diff_jpeg_forward(x, quality=80):
    """DiffJPEG.forward.  x: NCHW (B, 3, H, W) float32 in [0, 1]."""
    factor = quality_to_factor(quality)
    b, c, h, w = x.shape
    oh, ow = h, w
    top = left = 0
    if h % 16 != 0 or w % 16 != 0:
        hp = ((h - 1) // 16 + 1) * 16
        wp = ((w - 1) // 16 + 1) * 16
        vpad, wpad = hp - oh, wp - ow
        top, bottom = vpad // 2, vpad - vpad // 2
        left, right = wpad // 2, wpad - wpad // 2
        x = jnp.pad(x, ((0, 0), (0, 0), (top, bottom), (left, right)),
                    mode='edge')  # torch 'replicate' == jnp 'edge'
        h, w = hp, wp

    # ---- compress: RGB -> YCbCr (x255 folded into the matrix), 2x2 chroma mean ----
    nhwc = jnp.transpose(x.astype(jnp.float32), (0, 2, 3, 1))          # (B, H, W, 3)
    ycc = jnp.tensordot(nhwc, jnp.asarray(_RGB2YCBCR_M * np.float32(255.0)),
                        axes=1) + jnp.asarray(_RGB2YCBCR_SHIFT)
    y = ycc[..., 0]
    cb = ycc[..., 1].reshape(b, h // 2, 2, w // 2, 2).mean(axis=(2, 4))
    cr = ycc[..., 2].reshape(b, h // 2, 2, w // 2, 2).mean(axis=(2, 4))

    # ---- hot path in a single Pallas call: DCT, quantize, diff-round,
    #      dequantize, IDCT for Y + Cb + Cr blocks ----
    y_blocks = _block_split(y)                                         # (NBY, 64)
    c_blocks = jnp.concatenate([_block_split(cb), _block_split(cr)], axis=0)
    y_rec_f, c_rec_f = _jpeg_core_fused(y_blocks, c_blocks, factor)

    nbc = c_rec_f.shape[0] // 2
    y_rec = _block_merge(y_rec_f, b, h, w)
    cb_rec = _block_merge(c_rec_f[:nbc], b, h // 2, w // 2)
    cr_rec = _block_merge(c_rec_f[nbc:], b, h // 2, w // 2)

    # ---- decompress: chroma upsample (NN x2), YCbCr -> RGB (/255 folded), clamp ----
    cb_up = jnp.repeat(jnp.repeat(cb_rec, 2, axis=1), 2, axis=2)
    cr_up = jnp.repeat(jnp.repeat(cr_rec, 2, axis=1), 2, axis=2)
    ycc_rec = jnp.stack([y_rec, cb_up, cr_up], axis=-1)                # (B, H, W, 3)
    rgb = jnp.tensordot(ycc_rec + jnp.asarray(_YCBCR2RGB_SHIFT),
                        jnp.asarray(_YCBCR2RGB_M / np.float32(255.0)), axes=1)
    out = jnp.transpose(jnp.clip(rgb, 0.0, 1.0), (0, 3, 1, 2))         # NCHW

    if oh != h or ow != w:
        out = out[:, :, top:top + oh, left:left + ow]
    return out


if __name__ == "__main__":
    key = jax.random.PRNGKey(0)
    # (batch=2, channels=3 RGB, 16x16) — JPEG needs 3 channels; 16|H,W so no pad.
    x = jax.random.uniform(key, (2, 3, 16, 16), dtype=jnp.float32)

    fwd = jax.jit(lambda v: diff_jpeg_forward(v, quality=80))
    out = jax.block_until_ready(fwd(x))

    assert out.shape == x.shape, (out.shape, x.shape)
    assert bool(jnp.all(jnp.isfinite(out)))
    assert bool(jnp.all((out >= 0.0) & (out <= 1.0)))
    print("KERNEL_OK")
</pallas_src>

<mosaic_0001>
module attributes {stable_mosaic.version = 11 : i64} {
  func.func @kernel(%arg0: i32, %arg1: memref<8x128xf32, #tpu.memory_space<vmem>>, %arg2: memref<128x128xbf16, #tpu.memory_space<vmem>>, %arg3: memref<128x128xbf16, #tpu.memory_space<vmem>>, %arg4: memref<8x128xf32, #tpu.memory_space<vmem>>, %arg5: memref<8x128xf32, #tpu.memory_space<vmem>>) attributes {dimension_semantics = [#tpu.dimension_semantics<parallel>], iteration_bounds = array<i64: 1>, scalar_prefetch = 0 : i64, scratch_operands = 0 : i64, tpu.core_type = #tpu.core_type<tc>, window_params = [{transform_indices = @transform_0, window_bounds = array<i64: 8, 128>}, {pipeline_mode = #tpu.pipeline_mode<synchronous>, transform_indices = @transform_1, window_bounds = array<i64: 128, 128>}, {pipeline_mode = #tpu.pipeline_mode<synchronous>, transform_indices = @transform_2, window_bounds = array<i64: 128, 128>}, {pipeline_mode = #tpu.pipeline_mode<synchronous>, transform_indices = @transform_3, window_bounds = array<i64: 8, 128>}, {transform_indices = @transform_4, window_bounds = array<i64: 8, 128>}]} {
    %c8_i32 = arith.constant 8 : i32
    %0 = arith.muli %arg0, %c8_i32 : i32
    %1 = tpu.iota {dimensions = array<i32: 0>} : vector<8x128xi32>
    %2 = vector.broadcast %0 : i32 to vector<8x128xi32>
    %3 = arith.addi %1, %2 : vector<8x128xi32>
    %c4_i32 = arith.constant 4 : i32
    %4 = vector.broadcast %c4_i32 : i32 to vector<8x128xi32>
    %5 = arith.cmpi sge, %3, %4 : vector<8x128xi32>
    %c0 = arith.constant 0 : index
    %c0_0 = arith.constant 0 : index
    %6 = vector.load %arg4[%c0, %c0_0] : memref<8x128xf32, #tpu.memory_space<vmem>>, vector<8x128xf32>
    %7 = vector.extract_strided_slice %6 {offsets = [2, 0], sizes = [1, 128], strides = [1, 1]} : vector<8x128xf32> to vector<1x128xf32>
    %8 = vector.extract_strided_slice %6 {offsets = [0, 0], sizes = [1, 128], strides = [1, 1]} : vector<8x128xf32> to vector<1x128xf32>
    %9 = vector.shape_cast %7 : vector<1x128xf32> to vector<1x128xf32>
    %10 = vector.broadcast %9 : vector<1x128xf32> to vector<8x128xf32>
    %11 = vector.shape_cast %8 : vector<1x128xf32> to vector<1x128xf32>
    %12 = vector.broadcast %11 : vector<1x128xf32> to vector<8x128xf32>
    %13 = arith.select %5, %10, %12 : vector<8x128xi1>, vector<8x128xf32>
    %14 = vector.extract_strided_slice %6 {offsets = [3, 0], sizes = [1, 128], strides = [1, 1]} : vector<8x128xf32> to vector<1x128xf32>
    %15 = vector.extract_strided_slice %6 {offsets = [1, 0], sizes = [1, 128], strides = [1, 1]} : vector<8x128xf32> to vector<1x128xf32>
    %16 = vector.shape_cast %14 : vector<1x128xf32> to vector<1x128xf32>
    %17 = vector.broadcast %16 : vector<1x128xf32> to vector<8x128xf32>
    %18 = vector.shape_cast %15 : vector<1x128xf32> to vector<1x128xf32>
    %19 = vector.broadcast %18 : vector<1x128xf32> to vector<8x128xf32>
    %20 = arith.select %5, %17, %19 : vector<8x128xi1>, vector<8x128xf32>
    %c0_1 = arith.constant 0 : index
    %c0_2 = arith.constant 0 : index
    %21 = vector.load %arg1[%c0_1, %c0_2] : memref<8x128xf32, #tpu.memory_space<vmem>>, vector<8x128xf32>
    %cst = arith.constant 1.280000e+02 : f32
    %22 = vector.broadcast %cst : f32 to vector<8x128xf32>
    %23 = arith.subf %21, %22 : vector<8x128xf32>
    %24 = arith.truncf %23 : vector<8x128xf32> to vector<8x128xbf16>
    %c0_3 = arith.constant 0 : index
    %c0_4 = arith.constant 0 : index
    %25 = vector.load %arg2[%c0_3, %c0_4] : memref<128x128xbf16, #tpu.memory_space<vmem>>, vector<128x128xbf16>
    %cst_5 = arith.constant dense<0.000000e+00> : vector<8x128xf32>
    %26 = tpu.matmul %24, %25, %cst_5 {dimension_numbers = #tpu.dot_dimension_numbers<[1], [0], [0], [1], [0, 0, 1, 1], [], []>} : vector<8x128xbf16>, vector<128x128xbf16>, vector<8x128xf32> -> vector<8x128xf32>
    %27 = arith.mulf %26, %13 : vector<8x128xf32>
    %28 = math.roundeven %27 : vector<8x128xf32>
    %29 = arith.subf %27, %28 : vector<8x128xf32>
    %30 = arith.mulf %29, %29 : vector<8x128xf32>
    %31 = arith.mulf %29, %30 : vector<8x128xf32>
    %32 = arith.addf %28, %31 : vector<8x128xf32>
    %33 = arith.mulf %32, %20 : vector<8x128xf32>
    %34 = arith.truncf %33 : vector<8x128xf32> to vector<8x128xbf16>
    %c0_6 = arith.constant 0 : index
    %c0_7 = arith.constant 0 : index
    %35 = vector.load %arg3[%c0_6, %c0_7] : memref<128x128xbf16, #tpu.memory_space<vmem>>, vector<128x128xbf16>
    %cst_8 = arith.constant dense<0.000000e+00> : vector<8x128xf32>
    %36 = tpu.matmul %34, %35, %cst_8 {dimension_numbers = #tpu.dot_dimension_numbers<[1], [0], [0], [1], [0, 0, 1, 1], [], []>} : vector<8x128xbf16>, vector<128x128xbf16>, vector<8x128xf32> -> vector<8x128xf32>
    %cst_9 = arith.constant 1.280000e+02 : f32
    %37 = vector.broadcast %cst_9 : f32 to vector<8x128xf32>
    %38 = arith.addf %36, %37 : vector<8x128xf32>
    %c0_10 = arith.constant 0 : index
    %c0_11 = arith.constant 0 : index
    %39 = vector.load %arg5[%c0_10, %c0_11] : memref<8x128xf32, #tpu.memory_space<vmem>>, vector<8x128xf32>
    tpu.vector_store %arg5[%c0_10, %c0_11], %38 {strides = array<i32>} : memref<8x128xf32, #tpu.memory_space<vmem>>, vector<8x128xf32>,
    return
  }
  func.func @transform_0(%arg0: i32) -> (i32, i32) {
    %c0_i32 = arith.constant 0 : i32
    %c0_i32_0 = arith.constant 0 : i32
    return %arg0, %c0_i32 : i32, i32
  }
  func.func @transform_1(%arg0: i32) -> (i32, i32) {
    %c0_i32 = arith.constant 0 : i32
    %c0_i32_0 = arith.constant 0 : i32
    %c0_i32_1 = arith.constant 0 : i32
    return %c0_i32, %c0_i32_0 : i32, i32
  }
  func.func @transform_2(%arg0: i32) -> (i32, i32) {
    %c0_i32 = arith.constant 0 : i32
    %c0_i32_0 = arith.constant 0 : i32
    %c0_i32_1 = arith.constant 0 : i32
    return %c0_i32, %c0_i32_0 : i32, i32
  }
  func.func @transform_3(%arg0: i32) -> (i32, i32) {
    %c0_i32 = arith.constant 0 : i32
    %c0_i32_0 = arith.constant 0 : i32
    %c0_i32_1 = arith.constant 0 : i32
    return %c0_i32, %c0_i32_0 : i32, i32
  }
  func.func @transform_4(%arg0: i32) -> (i32, i32) {
    %c0_i32 = arith.constant 0 : i32
    %c0_i32_0 = arith.constant 0 : i32
    return %arg0, %c0_i32 : i32, i32
  }
}

</mosaic_0001>

<llo_original>
// kernel: squeeze.5
$region0: #{squeeze.5}
  %s0 = inlined_call_operand.vmem [shape: f32[2,16,16], index: 0, kind: input, shape index: {}]
  %s1 = inlined_call_operand.vmem [shape: f32[2,2,8,2,8], index: 1, kind: output, shape index: {}]
  $region1: #{squeeze.5} parent=0
    #allocation0 [shape = 'u8[131072]{0}', space=vmem, size = 0x20000, scoped, tag = 'scoped mem for output reshape']
    %v2 = vld [vmem:[%s0] sm:$0xff]
    %vm3 = vcmask 64512
    %4 = vst.msk [vmem:[#allocation0] ss:$8 sm:$0xf] %vm3, %v2
    %5 = vst.msk [vmem:[#allocation0] ss:$8 sm:$0xf0] %vm3, %v2
    %s6 = scalar_lea.vmem %s0, 8
    %v7 = vld [vmem:[%s6] sm:$0xff]
    %vm8 = vcmask 64512
    %s9 = scalar_lea.vmem [#allocation0], 64
    %10 = vst.msk [vmem:[%s9] ss:$8 sm:$0xf] %vm8, %v7
    %s11 = scalar_lea.vmem [#allocation0], 64
    %12 = vst.msk [vmem:[%s11] ss:$8 sm:$0xf0] %vm8, %v7
    %s13 = scalar_lea.vmem %s0, 16
    %v14 = vld [vmem:[%s13] sm:$0xff]
    %vm15 = vcmask 64512
    %s16 = scalar_lea.vmem [#allocation0], 128
    %17 = vst.msk [vmem:[%s16] ss:$8 sm:$0xf] %vm15, %v14
    %s18 = scalar_lea.vmem [#allocation0], 128
    %19 = vst.msk [vmem:[%s18] ss:$8 sm:$0xf0] %vm15, %v14
    %s20 = scalar_lea.vmem %s0, 24
    %v21 = vld [vmem:[%s20] sm:$0xff]
    %vm22 = vcmask 64512
    %s23 = scalar_lea.vmem [#allocation0], 192
    %24 = vst.msk [vmem:[%s23] ss:$8 sm:$0xf] %vm22, %v21
    %s25 = scalar_lea.vmem [#allocation0], 192
    %26 = vst.msk [vmem:[%s25] ss:$8 sm:$0xf0] %vm22, %v21
    %v27 = vld [vmem:[%s0] sm:$0xff]
    %28 = vrot.lane.b32.xlu0 %v27, 120
    %v29 = vpop.permute.xlu0 %28
    %vm30 = vcmask 64512
    %s31 = scalar_lea.vmem [#allocation0], 1
    %32 = vst.msk [vmem:[%s31] ss:$8 sm:$0xf] %vm30, %v29
    %s33 = scalar_lea.vmem [#allocation0], 1
    %34 = vst.msk [vmem:[%s33] ss:$8 sm:$0xf0] %vm30, %v29
    %s35 = scalar_lea.vmem %s0, 8
    %v36 = vld [vmem:[%s35] sm:$0xff]
    %37 = vrot.lane.b32.xlu0 %v36, 120
    %v38 = vpop.permute.xlu0 %37
    %vm39 = vcmask 64512
    %s40 = scalar_lea.vmem [#allocation0], 65
    %41 = vst.msk [vmem:[%s40] ss:$8 sm:$0xf] %vm39, %v38
    %s42 = scalar_lea.vmem [#allocation0], 65
    %43 = vst.msk [vmem:[%s42] ss:$8 sm:$0xf0] %vm39, %v38
    %s44 = scalar_lea.vmem %s0, 16
    %v45 = vld [vmem:[%s44] sm:$0xff]
    %46 = vrot.lane.b32.xlu0 %v45, 120
    %v47 = vpop.permute.xlu0 %46
    %vm48 = vcmask 64512
    %s49 = scalar_lea.vmem [#allocation0], 129
    %50 = vst.msk [vmem:[%s49] ss:$8 sm:$0xf] %vm48, %v47
    %s51 = scalar_lea.vmem [#allocation0], 129
    %52 = vst.msk [vmem:[%s51] ss:$8 sm:$0xf0] %vm48, %v47
    %s53 = scalar_lea.vmem %s0, 24
    %v54 = vld [vmem:[%s53] sm:$0xff]
    %55 = vrot.lane.b32.xlu0 %v54, 120
    %v56 = vpop.permute.xlu0 %55
    %vm57 = vcmask 64512
    %s58 = scalar_lea.vmem [#allocation0], 193
    %59 = vst.msk [vmem:[%s58] ss:$8 sm:$0xf] %vm57, %v56
    %s60 = scalar_lea.vmem [#allocation0], 193
    %61 = vst.msk [vmem:[%s60] ss:$8 sm:$0xf0] %vm57, %v56
    %s63 = sshll.u32 1, 2
    %s64 = ssub.s32 %s63, 1
    %v66 = vld [vmem:[#allocation0] sm:%s64]
    %s67 = sshll.u32 1, 2
    %s68 = ssub.s32 %s67, 1
    %69 = vst [vmem:[%s1] sm:%s68] %v66
    %s70 = scalar_lea.vmem [#allocation0], 8
    %v71 = vld [vmem:[%s70] sm:%s64]
    %s72 = sshll.u32 1, 2
    %s73 = ssub.s32 %s72, 1
    %s74 = scalar_lea.vmem %s1, 2
    %75 = vst [vmem:[%s74] sm:%s73] %v71
    %s76 = scalar_lea.vmem [#allocation0], 16
    %v77 = vld [vmem:[%s76] sm:%s64]
    %s78 = sshll.u32 1, 2
    %s79 = ssub.s32 %s78, 1
    %s80 = smul.addr 2, 2
    %s81 = scalar_lea.vmem %s1, %s80
    %82 = vst [vmem:[%s81] sm:%s79] %v77
    %s83 = scalar_lea.vmem [#allocation0], 24
    %v84 = vld [vmem:[%s83] sm:%s64]
    %s85 = sshll.u32 1, 2
    %s86 = ssub.s32 %s85, 1
    %s87 = smul.addr 2, 3
    %s88 = scalar_lea.vmem %s1, %s87
    %89 = vst [vmem:[%s88] sm:%s86] %v84
    %s90 = scalar_lea.vmem [#allocation0], 32
    %v91 = vld [vmem:[%s90] sm:%s64]
    %s92 = sshll.u32 1, 2
    %s93 = ssub.s32 %s92, 1
    %s94 = smul.addr 2, 4
    %s95 = scalar_lea.vmem %s1, %s94
    %96 = vst [vmem:[%s95] sm:%s93] %v91
    %s97 = scalar_lea.vmem [#allocation0], 40
    %v98 = vld [vmem:[%s97] sm:%s64]
    %s99 = sshll.u32 1, 2
    %s100 = ssub.s32 %s99, 1
    %s101 = smul.addr 2, 5
    %s102 = scalar_lea.vmem %s1, %s101
    %103 = vst [vmem:[%s102] sm:%s100] %v98
    %s104 = scalar_lea.vmem [#allocation0], 48
    %v105 = vld [vmem:[%s104] sm:%s64]
    %s106 = sshll.u32 1, 2
    %s107 = ssub.s32 %s106, 1
    %s108 = smul.addr 2, 6
    %s109 = scalar_lea.vmem %s1, %s108
    %110 = vst [vmem:[%s109] sm:%s107] %v105
    %s111 = scalar_lea.vmem [#allocation0], 56
    %v112 = vld [vmem:[%s111] sm:%s64]
    %s113 = sshll.u32 1, 2
    %s114 = ssub.s32 %s113, 1
    %s115 = smul.addr 2, 7
    %s116 = scalar_lea.vmem %s1, %s115
    %117 = vst [vmem:[%s116] sm:%s114] %v112
    %s118 = scalar_lea.vmem [#allocation0], 64
    %v119 = vld [vmem:[%s118] sm:%s64]
    %s120 = sshll.u32 1, 2
    %s121 = ssub.s32 %s120, 1
    %s122 = smul.addr 2, 8
    %s123 = scalar_lea.vmem %s1, %s122
    %124 = vst [vmem:[%s123] sm:%s121] %v119
    %s125 = scalar_lea.vmem [#allocation0], 72
    %v126 = vld [vmem:[%s125] sm:%s64]
    %s127 = sshll.u32 1, 2
    %s128 = ssub.s32 %s127, 1
    %s129 = smul.addr 2, 9
    %s130 = scalar_lea.vmem %s1, %s129
    %131 = vst [vmem:[%s130] sm:%s128] %v126
    %s132 = scalar_lea.vmem [#allocation0], 80
    %v133 = vld [vmem:[%s132] sm:%s64]
    %s134 = sshll.u32 1, 2
    %s135 = ssub.s32 %s134, 1
    %s136 = smul.addr 2, 10
    %s137 = scalar_lea.vmem %s1, %s136
    %138 = vst [vmem:[%s137] sm:%s135] %v133
    %s139 = scalar_lea.vmem [#allocation0], 88
    %v140 = vld [vmem:[%s139] sm:%s64]
    %s141 = sshll.u32 1, 2
    %s142 = ssub.s32 %s141, 1
    %s143 = smul.addr 2, 11
    %s144 = scalar_lea.vmem %s1, %s143
    %145 = vst [vmem:[%s144] sm:%s142] %v140
    %s146 = scalar_lea.vmem [#allocation0], 96
    %v147 = vld [vmem:[%s146] sm:%s64]
    %s148 = sshll.u32 1, 2
    %s149 = ssub.s32 %s148, 1
    %s150 = smul.addr 2, 12
    %s151 = scalar_lea.vmem %s1, %s150
    %152 = vst [vmem:[%s151] sm:%s149] %v147
    %s153 = scalar_lea.vmem [#allocation0], 104
    %v154 = vld [vmem:[%s153] sm:%s64]
    %s155 = sshll.u32 1, 2
    %s156 = ssub.s32 %s155, 1
    %s157 = smul.addr 2, 13
    %s158 = scalar_lea.vmem %s1, %s157
    %159 = vst [vmem:[%s158] sm:%s156] %v154
    %s160 = scalar_lea.vmem [#allocation0], 112
    %v161 = vld [vmem:[%s160] sm:%s64]
    %s162 = sshll.u32 1, 2
    %s163 = ssub.s32 %s162, 1
    %s164 = smul.addr 2, 14
    %s165 = scalar_lea.vmem %s1, %s164
    %166 = vst [vmem:[%s165] sm:%s163] %v161
    %s167 = scalar_lea.vmem [#allocation0], 120
    %v168 = vld [vmem:[%s167] sm:%s64]
    %s169 = sshll.u32 1, 2
    %s170 = ssub.s32 %s169, 1
    %s171 = smul.addr 2, 15
    %s172 = scalar_lea.vmem %s1, %s171
    %173 = vst [vmem:[%s172] sm:%s170] %v168
    %s174 = scalar_lea.vmem [#allocation0], 128
    %v175 = vld [vmem:[%s174] sm:%s64]
    %s176 = sshll.u32 1, 2
    %s177 = ssub.s32 %s176, 1
    %s178 = smul.addr 2, 16
    %s179 = scalar_lea.vmem %s1, %s178
    %180 = vst [vmem:[%s179] sm:%s177] %v175
    %s181 = scalar_lea.vmem [#allocation0], 136
    %v182 = vld [vmem:[%s181] sm:%s64]
    %s183 = sshll.u32 1, 2
    %s184 = ssub.s32 %s183, 1
    %s185 = smul.addr 2, 17
    %s186 = scalar_lea.vmem %s1, %s185
    %187 = vst [vmem:[%s186] sm:%s184] %v182
    %s188 = scalar_lea.vmem [#allocation0], 144
    %v189 = vld [vmem:[%s188] sm:%s64]
    %s190 = sshll.u32 1, 2
    %s191 = ssub.s32 %s190, 1
    %s192 = smul.addr 2, 18
    %s193 = scalar_lea.vmem %s1, %s192
    %194 = vst [vmem:[%s193] sm:%s191] %v189
    %s195 = scalar_lea.vmem [#allocation0], 152
    %v196 = vld [vmem:[%s195] sm:%s64]
    %s197 = sshll.u32 1, 2
    %s198 = ssub.s32 %s197, 1
    %s199 = smul.addr 2, 19
    %s200 = scalar_lea.vmem %s1, %s199
    %201 = vst [vmem:[%s200] sm:%s198] %v196
    %s202 = scalar_lea.vmem [#allocation0], 160
    %v203 = vld [vmem:[%s202] sm:%s64]
    %s204 = sshll.u32 1, 2
    %s205 = ssub.s32 %s204, 1
    %s206 = smul.addr 2, 20
    %s207 = scalar_lea.vmem %s1, %s206
    %208 = vst [vmem:[%s207] sm:%s205] %v203
    %s209 = scalar_lea.vmem [#allocation0], 168
    %v210 = vld [vmem:[%s209] sm:%s64]
    %s211 = sshll.u32 1, 2
    %s212 = ssub.s32 %s211, 1
    %s213 = smul.addr 2, 21
    %s214 = scalar_lea.vmem %s1, %s213
    %215 = vst [vmem:[%s214] sm:%s212] %v210
    %s216 = scalar_lea.vmem [#allocation0], 176
    %v217 = vld [vmem:[%s216] sm:%s64]
    %s218 = sshll.u32 1, 2
    %s219 = ssub.s32 %s218, 1
    %s220 = smul.addr 2, 22
    %s221 = scalar_lea.vmem %s1, %s220
    %222 = vst [vmem:[%s221] sm:%s219] %v217
    %s223 = scalar_lea.vmem [#allocation0], 184
    %v224 = vld [vmem:[%s223] sm:%s64]
    %s225 = sshll.u32 1, 2
    %s226 = ssub.s32 %s225, 1
    %s227 = smul.addr 2, 23
    %s228 = scalar_lea.vmem %s1, %s227
    %229 = vst [vmem:[%s228] sm:%s226] %v224
    %s230 = scalar_lea.vmem [#allocation0], 192
    %v231 = vld [vmem:[%s230] sm:%s64]
    %s232 = sshll.u32 1, 2
    %s233 = ssub.s32 %s232, 1
    %s234 = smul.addr 2, 24
    %s235 = scalar_lea.vmem %s1, %s234
    %236 = vst [vmem:[%s235] sm:%s233] %v231
    %s237 = scalar_lea.vmem [#allocation0], 200
    %v238 = vld [vmem:[%s237] sm:%s64]
    %s239 = sshll.u32 1, 2
    %s240 = ssub.s32 %s239, 1
    %s241 = smul.addr 2, 25
    %s242 = scalar_lea.vmem %s1, %s241
    %243 = vst [vmem:[%s242] sm:%s240] %v238
    %s244 = scalar_lea.vmem [#allocation0], 208
    %v245 = vld [vmem:[%s244] sm:%s64]
    %s246 = sshll.u32 1, 2
    %s247 = ssub.s32 %s246, 1
    %s248 = smul.addr 2, 26
    %s249 = scalar_lea.vmem %s1, %s248
    %250 = vst [vmem:[%s249] sm:%s247] %v245
    %s251 = scalar_lea.vmem [#allocation0], 216
    %v252 = vld [vmem:[%s251] sm:%s64]
    %s253 = sshll.u32 1, 2
    %s254 = ssub.s32 %s253, 1
    %s255 = smul.addr 2, 27
    %s256 = scalar_lea.vmem %s1, %s255
    %257 = vst [vmem:[%s256] sm:%s254] %v252
    %s258 = scalar_lea.vmem [#allocation0], 224
    %v259 = vld [vmem:[%s258] sm:%s64]
    %s260 = sshll.u32 1, 2
    %s261 = ssub.s32 %s260, 1
    %s262 = smul.addr 2, 28
    %s263 = scalar_lea.vmem %s1, %s262
    %264 = vst [vmem:[%s263] sm:%s261] %v259
    %s265 = scalar_lea.vmem [#allocation0], 232
    %v266 = vld [vmem:[%s265] sm:%s64]
    %s267 = sshll.u32 1, 2
    %s268 = ssub.s32 %s267, 1
    %s269 = smul.addr 2, 29
    %s270 = scalar_lea.vmem %s1, %s269
    %271 = vst [vmem:[%s270] sm:%s268] %v266
    %s272 = scalar_lea.vmem [#allocation0], 240
    %v273 = vld [vmem:[%s272] sm:%s64]
    %s274 = sshll.u32 1, 2
    %s275 = ssub.s32 %s274, 1
    %s276 = smul.addr 2, 30
    %s277 = scalar_lea.vmem %s1, %s276
    %278 = vst [vmem:[%s277] sm:%s275] %v273
    %s279 = scalar_lea.vmem [#allocation0], 248
    %v280 = vld [vmem:[%s279] sm:%s64]
    %s281 = sshll.u32 1, 2
    %s282 = ssub.s32 %s281, 1
    %s283 = smul.addr 2, 31
    %s284 = scalar_lea.vmem %s1, %s283
    %285 = vst [vmem:[%s284] sm:%s282] %v280

// kernel: squeeze.4
$region0: #{squeeze.4}
  %s0 = inlined_call_operand.vmem [shape: f32[2,16,16], index: 0, kind: input, shape index: {}]
  %s1 = inlined_call_operand.vmem [shape: f32[2,8,2,8,2], index: 1, kind: output, shape index: {}]
  %v2 = vld [vmem:[%s0] sm:$0xff]
  %vm3 = vcmask 15360
  %4 = vst.msk [vmem:[%s1] ss:$8 sm:$0xf] %vm3, %v2
  %5 = vst.msk [vmem:[%s1] ss:$8 sm:$0xf0] %vm3, %v2
  %s6 = scalar_lea.vmem %s0, 8
  %v7 = vld [vmem:[%s6] sm:$0xff]
  %vm8 = vcmask 15360
  %s9 = scalar_lea.vmem %s1, 64
  %10 = vst.msk [vmem:[%s9] ss:$8 sm:$0xf] %vm8, %v7
  %s11 = scalar_lea.vmem %s1, 64
  %12 = vst.msk [vmem:[%s11] ss:$8 sm:$0xf0] %vm8, %v7
  %s13 = scalar_lea.vmem %s0, 16
  %v14 = vld [vmem:[%s13] sm:$0xff]
  %vm15 = vcmask 15360
  %s16 = scalar_lea.vmem %s1, 128
  %17 = vst.msk [vmem:[%s16] ss:$8 sm:$0xf] %vm15, %v14
  %s18 = scalar_lea.vmem %s1, 128
  %19 = vst.msk [vmem:[%s18] ss:$8 sm:$0xf0] %vm15, %v14
  %s20 = scalar_lea.vmem %s0, 24
  %v21 = vld [vmem:[%s20] sm:$0xff]
  %vm22 = vcmask 15360
  %s23 = scalar_lea.vmem %s1, 192
  %24 = vst.msk [vmem:[%s23] ss:$8 sm:$0xf] %vm22, %v21
  %s25 = scalar_lea.vmem %s1, 192
  %26 = vst.msk [vmem:[%s25] ss:$8 sm:$0xf0] %vm22, %v21
  %v27 = vld [vmem:[%s0] sm:$0xff]
  %28 = vrot.lane.b32.xlu0 %v27, 126
  %v29 = vpop.permute.xlu0 %28
  %vm30 = vcmask 15360
  %s31 = scalar_lea.vmem %s1, 1
  %32 = vst.msk [vmem:[%s31] ss:$8 sm:$0xf] %vm30, %v29
  %s33 = scalar_lea.vmem %s1, 1
  %34 = vst.msk [vmem:[%s33] ss:$8 sm:$0xf0] %vm30, %v29
  %s35 = scalar_lea.vmem %s0, 8
  %v36 = vld [vmem:[%s35] sm:$0xff]
  %37 = vrot.lane.b32.xlu0 %v36, 126
  %v38 = vpop.permute.xlu0 %37
  %vm39 = vcmask 15360
  %s40 = scalar_lea.vmem %s1, 65
  %41 = vst.msk [vmem:[%s40] ss:$8 sm:$0xf] %vm39, %v38
  %s42 = scalar_lea.vmem %s1, 65
  %43 = vst.msk [vmem:[%s42] ss:$8 sm:$0xf0] %vm39, %v38
  %s44 = scalar_lea.vmem %s0, 16
  %v45 = vld [vmem:[%s44] sm:$0xff]
  %46 = vrot.lane.b32.xlu0 %v45, 126
  %v47 = vpop.permute.xlu0 %46
  %vm48 = vcmask 15360
  %s49 = scalar_lea.vmem %s1, 129
  %50 = vst.msk [vmem:[%s49] ss:$8 sm:$0xf] %vm48, %v47
  %s51 = scalar_lea.vmem %s1, 129
  %52 = vst.msk [vmem:[%s51] ss:$8 sm:$0xf0] %vm48, %v47
  %s53 = scalar_lea.vmem %s0, 24
  %v54 = vld [vmem:[%s53] sm:$0xff]
  %55 = vrot.lane.b32.xlu0 %v54, 126
  %v56 = vpop.permute.xlu0 %55
  %vm57 = vcmask 15360
  %s58 = scalar_lea.vmem %s1, 193
  %59 = vst.msk [vmem:[%s58] ss:$8 sm:$0xf] %vm57, %v56
  %s60 = scalar_lea.vmem %s1, 193
  %61 = vst.msk [vmem:[%s60] ss:$8 sm:$0xf0] %vm57, %v56
  %v62 = vld [vmem:[%s0] sm:$0xff]
  %63 = vrot.lane.b32.xlu0 %v62, 124
  %v64 = vpop.permute.xlu0 %63
  %vm65 = vcmask 15360
  %s66 = scalar_lea.vmem %s1, 2
  %67 = vst.msk [vmem:[%s66] ss:$8 sm:$0xf] %vm65, %v64
  %s68 = scalar_lea.vmem %s1, 2
  %69 = vst.msk [vmem:[%s68] ss:$8 sm:$0xf0] %vm65, %v64
  %s70 = scalar_lea.vmem %s0, 8
  %v71 = vld [vmem:[%s70] sm:$0xff]
  %72 = vrot.lane.b32.xlu0 %v71, 124
  %v73 = vpop.permute.xlu0 %72
  %vm74 = vcmask 15360
  %s75 = scalar_lea.vmem %s1, 66
  %76 = vst.msk [vmem:[%s75] ss:$8 sm:$0xf] %vm74, %v73
  %s77 = scalar_lea.vmem %s1, 66
  %78 = vst.msk [vmem:[%s77] ss:$8 sm:$0xf0] %vm74, %v73
  %s79 = scalar_lea.vmem %s0, 16
  %v80 = vld [vmem:[%s79] sm:$0xff]
  %81 = vrot.lane.b32.xlu0 %v80, 124
  %v82 = vpop.permute.xlu0 %81
  %vm83 = vcmask 15360
  %s84 = scalar_lea.vmem %s1, 130
  %85 = vst.msk [vmem:[%s84] ss:$8 sm:$0xf] %vm83, %v82
  %s86 = scalar_lea.vmem %s1, 130
  %87 = vst.msk [vmem:[%s86] ss:$8 sm:$0xf0] %vm83, %v82
  %s88 = scalar_lea.vmem %s0, 24
  %v89 = vld [vmem:[%s88] sm:$0xff]
  %90 = vrot.lane.b32.xlu0 %v89, 124
  %v91 = vpop.permute.xlu0 %90
  %vm92 = vcmask 15360
  %s93 = scalar_lea.vmem %s1, 194
  %94 = vst.msk [vmem:[%s93] ss:$8 sm:$0xf] %vm92, %v91
  %s95 = scalar_lea.vmem %s1, 194
  %96 = vst.msk [vmem:[%s95] ss:$8 sm:$0xf0] %vm92, %v91
  %v97 = vld [vmem:[%s0] sm:$0xff]
  %98 = vrot.lane.b32.xlu0 %v97, 122
  %v99 = vpop.permute.xlu0 %98
  %vm100 = vcmask 15360
  %s101 = scalar_lea.vmem %s1, 3
  %102 = vst.msk [vmem:[%s101] ss:$8 sm:$0xf] %vm100, %v99
  %s103 = scalar_lea.vmem %s1, 3
  %104 = vst.msk [vmem:[%s103] ss:$8 sm:$0xf0] %vm100, %v99
  %s105 = scalar_lea.vmem %s0, 8
  %v106 = vld [vmem:[%s105] sm:$0xff]
  %107 = vrot.lane.b32.xlu0 %v106, 122
  %v108 = vpop.permute.xlu0 %107
  %vm109 = vcmask 15360
  %s110 = scalar_lea.vmem %s1, 67
  %111 = vst.msk [vmem:[%s110] ss:$8 sm:$0xf] %vm109, %v108
  %s112 = scalar_lea.vmem %s1, 67
  %113 = vst.msk [vmem:[%s112] ss:$8 sm:$0xf0] %vm109, %v108
  %s114 = scalar_lea.vmem %s0, 16
  %v115 = vld [vmem:[%s114] sm:$0xff]
  %116 = vrot.lane.b32.xlu0 %v115, 122
  %v117 = vpop.permute.xlu0 %116
  %vm118 = vcmask 15360
  %s119 = scalar_lea.vmem %s1, 131
  %120 = vst.msk [vmem:[%s119] ss:$8 sm:$0xf] %vm118, %v117
  %s121 = scalar_lea.vmem %s1, 131
  %122 = vst.msk [vmem:[%s121] ss:$8 sm:$0xf0] %vm118, %v117
  %s123 = scalar_lea.vmem %s0, 24
  %v124 = vld [vmem:[%s123] sm:$0xff]
  %125 = vrot.lane.b32.xlu0 %v124, 122
  %v126 = vpop.permute.xlu0 %125
  %vm127 = vcmask 15360
  %s128 = scalar_lea.vmem %s1, 195
  %129 = vst.msk [vmem:[%s128] ss:$8 sm:$0xf] %vm127, %v126
  %s130 = scalar_lea.vmem %s1, 195
  %131 = vst.msk [vmem:[%s130] ss:$8 sm:$0xf0] %vm127, %v126
  %v132 = vld [vmem:[%s0] sm:$0xff]
  %133 = vrot.lane.b32.xlu0 %v132, 120
  %v134 = vpop.permute.xlu0 %133
  %vm135 = vcmask 15360
  %s136 = scalar_lea.vmem %s1, 4
  %137 = vst.msk [vmem:[%s136] ss:$8 sm:$0xf] %vm135, %v134
  %s138 = scalar_lea.vmem %s1, 4
  %139 = vst.msk [vmem:[%s138] ss:$8 sm:$0xf0] %vm135, %v134
  %s140 = scalar_lea.vmem %s0, 8
  %v141 = vld [vmem:[%s140] sm:$0xff]
  %142 = vrot.lane.b32.xlu0 %v141, 120
  %v143 = vpop.permute.xlu0 %142
  %vm144 = vcmask 15360
  %s145 = scalar_lea.vmem %s1, 68
  %146 = vst.msk [vmem:[%s145] ss:$8 sm:$0xf] %vm144, %v143
  %s147 = scalar_lea.vmem %s1, 68
  %148 = vst.msk [vmem:[%s147] ss:$8 sm:$0xf0] %vm144, %v143
  %s149 = scalar_lea.vmem %s0, 16
  %v150 = vld [vmem:[%s149] sm:$0xff]
  %151 = vrot.lane.b32.xlu0 %v150, 120
  %v152 = vpop.permute.xlu0 %151
  %vm153 = vcmask 15360
  %s154 = scalar_lea.vmem %s1, 132
  %155 = vst.msk [vmem:[%s154] ss:$8 sm:$0xf] %vm153, %v152
  %s156 = scalar_lea.vmem %s1, 132
  %157 = vst.msk [vmem:[%s156] ss:$8 sm:$0xf0] %vm153, %v152
  %s158 = scalar_lea.vmem %s0, 24
  %v159 = vld [vmem:[%s158] sm:$0xff]
  %160 = vrot.lane.b32.xlu0 %v159, 120
  %v161 = vpop.permute.xlu0 %160
  %vm162 = vcmask 15360
  %s163 = scalar_lea.vmem %s1, 196
  %164 = vst.msk [vmem:[%s163] ss:$8 sm:$0xf] %vm162, %v161
  %s165 = scalar_lea.vmem %s1, 196
  %166 = vst.msk [vmem:[%s165] ss:$8 sm:$0xf0] %vm162, %v161
  %v167 = vld [vmem:[%s0] sm:$0xff]
  %168 = vrot.lane.b32.xlu0 %v167, 118
  %v169 = vpop.permute.xlu0 %168
  %vm170 = vcmask 15360
  %s171 = scalar_lea.vmem %s1, 5
  %172 = vst.msk [vmem:[%s171] ss:$8 sm:$0xf] %vm170, %v169
  %s173 = scalar_lea.vmem %s1, 5
  %174 = vst.msk [vmem:[%s173] ss:$8 sm:$0xf0] %vm170, %v169
  %s175 = scalar_lea.vmem %s0, 8
  %v176 = vld [vmem:[%s175] sm:$0xff]
  %177 = vrot.lane.b32.xlu0 %v176, 118
  %v178 = vpop.permute.xlu0 %177
  %vm179 = vcmask 15360
  %s180 = scalar_lea.vmem %s1, 69
  %181 = vst.msk [vmem:[%s180] ss:$8 sm:$0xf] %vm179, %v178
  %s182 = scalar_lea.vmem %s1, 69
  %183 = vst.msk [vmem:[%s182] ss:$8 sm:$0xf0] %vm179, %v178
  %s184 = scalar_lea.vmem %s0, 16
  %v185 = vld [vmem:[%s184] sm:$0xff]
  %186 = vrot.lane.b32.xlu0 %v185, 118
  %v187 = vpop.permute.xlu0 %186
  %vm188 = vcmask 15360
  %s189 = scalar_lea.vmem %s1, 133
  %190 = vst.msk [vmem:[%s189] ss:$8 sm:$0xf] %vm188, %v187
  %s191 = scalar_lea.vmem %s1, 133
  %192 = vst.msk [vmem:[%s191] ss:$8 sm:$0xf0] %vm188, %v187
  %s193 = scalar_lea.vmem %s0, 24
  %v194 = vld [vmem:[%s193] sm:$0xff]
  %195 = vrot.lane.b32.xlu0 %v194, 118
  %v196 = vpop.permute.xlu0 %195
  %vm197 = vcmask 15360
  %s198 = scalar_lea.vmem %s1, 197
  %199 = vst.msk [vmem:[%s198] ss:$8 sm:$0xf] %vm197, %v196
  %s200 = scalar_lea.vmem %s1, 197
  %201 = vst.msk [vmem:[%s200] ss:$8 sm:$0xf0] %vm197, %v196
  %v202 = vld [vmem:[%s0] sm:$0xff]
  %203 = vrot.lane.b32.xlu0 %v202, 116
  %v204 = vpop.permute.xlu0 %203
  %vm205 = vcmask 15360
  %s206 = scalar_lea.vmem %s1, 6
  %207 = vst.msk [vmem:[%s206] ss:$8 sm:$0xf] %vm205, %v204
  %s208 = scalar_lea.vmem %s1, 6
  %209 = vst.msk [vmem:[%s208] ss:$8 sm:$0xf0] %vm205, %v204
  %s210 = scalar_lea.vmem %s0, 8
  %v211 = vld [vmem:[%s210] sm:$0xff]
  %212 = vrot.lane.b32.xlu0 %v211, 116
  %v213 = vpop.permute.xlu0 %212
  %vm214 = vcmask 15360
  %s215 = scalar_lea.vmem %s1, 70
  %216 = vst.msk [vmem:[%s215] ss:$8 sm:$0xf] %vm214, %v213
  %s217 = scalar_lea.vmem %s1, 70
  %218 = vst.msk [vmem:[%s217] ss:$8 sm:$0xf0] %vm214, %v213
  %s219 = scalar_lea.vmem %s0, 16
  %v220 = vld [vmem:[%s219] sm:$0xff]
  %221 = vrot.lane.b32.xlu0 %v220, 116
  %v222 = vpop.permute.xlu0 %221
  %vm223 = vcmask 15360
  %s224 = scalar_lea.vmem %s1, 134
  %225 = vst.msk [vmem:[%s224] ss:$8 sm:$0xf] %vm223, %v222
  %s226 = scalar_lea.vmem %s1, 134
  %227 = vst.msk [vmem:[%s226] ss:$8 sm:$0xf0] %vm223, %v222
  %s228 = scalar_lea.vmem %s0, 24
  %v229 = vld [vmem:[%s228] sm:$0xff]
  %230 = vrot.lane.b32.xlu0 %v229, 116
  %v231 = vpop.permute.xlu0 %230
  %vm232 = vcmask 15360
  %s233 = scalar_lea.vmem %s1, 198
  %234 = vst.msk [vmem:[%s233] ss:$8 sm:$0xf] %vm232, %v231
  %s235 = scalar_lea.vmem %s1, 198
  %236 = vst.msk [vmem:[%s235] ss:$8 sm:$0xf0] %vm232, %v231
  %v237 = vld [vmem:[%s0] sm:$0xff]
  %238 = vrot.lane.b32.xlu0 %v237, 114
  %v239 = vpop.permute.xlu0 %238
  %vm240 = vcmask 15360
  %s241 = scalar_lea.vmem %s1, 7
  %242 = vst.msk [vmem:[%s241] ss:$8 sm:$0xf] %vm240, %v239
  %s243 = scalar_lea.vmem %s1, 7
  %244 = vst.msk [vmem:[%s243] ss:$8 sm:$0xf0] %vm240, %v239
  %s245 = scalar_lea.vmem %s0, 8
  %v246 = vld [vmem:[%s245] sm:$0xff]
  %247 = vrot.lane.b32.xlu0 %v246, 114
  %v248 = vpop.permute.xlu0 %247
  %vm249 = vcmask 15360
  %s250 = scalar_lea.vmem %s1, 71
  %251 = vst.msk [vmem:[%s250] ss:$8 sm:$0xf] %vm249, %v248
  %s252 = scalar_lea.vmem %s1, 71
  %253 = vst.msk [vmem:[%s252] ss:$8 sm:$0xf0] %vm249, %v248
  %s254 = scalar_lea.vmem %s0, 16
  %v255 = vld [vmem:[%s254] sm:$0xff]
  %256 = vrot.lane.b32.xlu0 %v255, 114
  %v257 = vpop.permute.xlu0 %256
  %vm258 = vcmask 15360
  %s259 = scalar_lea.vmem %s1, 135
  %260 = vst.msk [vmem:[%s259] ss:$8 sm:$0xf] %vm258, %v257
  %s261 = scalar_lea.vmem %s1, 135
  %262 = vst.msk [vmem:[%s261] ss:$8 sm:$0xf0] %vm258, %v257
  %s263 = scalar_lea.vmem %s0, 24
  %v264 = vld [vmem:[%s263] sm:$0xff]
  %265 = vrot.lane.b32.xlu0 %v264, 114
  %v266 = vpop.permute.xlu0 %265
  %vm267 = vcmask 15360
  %s268 = scalar_lea.vmem %s1, 199
  %269 = vst.msk [vmem:[%s268] ss:$8 sm:$0xf] %vm267, %v266
  %s270 = scalar_lea.vmem %s1, 199
  %271 = vst.msk [vmem:[%s270] ss:$8 sm:$0xf0] %vm267, %v266

// kernel: _lambda_.1
$region0: #{_lambda_.1}
  #allocation0 [shape = 'u32[]', space=smem, size = 0x4, offset = 0x4, fixed_abs, tag = 'smem constant byte address 0x4 - core index']
  #allocation1 [shape = 'u32[144,128]{1,0:T(1,128)}', space=vmem, size = 0x12000, scoped, tag = 'internal scratch']
  %s0 = inlined_call_operand.vmem [shape: f32[8,128], index: 0, kind: input, shape index: {}]
  %s1 = inlined_call_operand.vmem [shape: bf16[128,128], index: 1, kind: input, shape index: {}]
  %s2 = inlined_call_operand.vmem [shape: bf16[128,128], index: 2, kind: input, shape index: {}]
  %s3 = inlined_call_operand.vmem [shape: f32[8,128], index: 3, kind: input, shape index: {}]
  %s4 = inlined_call_operand.vmem [shape: f32[8,128], index: 4, kind: output, shape index: {}]
  %s5 = sld [smem:[#allocation0]]
  $region26: #{_lambda_.1} parent=0
    _
  %s7 = ssub.s32 1, %s5
  %s8 = scalar_select 0, %s7, %s5
  // Predicated region
  $region2: #{_lambda_.1} parent=0 // pred_check
    _
  $region3: #{_lambda_.1} parent=0 // pred_check_branch
    %10 = sbr.rel (0) target = $region5
  $region4: #{_lambda_.1} parent=0 // pred_region
    _
  $region5: #{_lambda_.1} parent=0 // pred_fallthru
    _
  // Predicated region
  $region6: #{_lambda_.1} parent=0 // pred_check
    _
  $region7: #{_lambda_.1} parent=0 // pred_check_branch
    %12 = sbr.rel (0) target = $region9
  $region8: #{_lambda_.1} parent=0 // pred_region
    _
  $region9: #{_lambda_.1} parent=0 // pred_fallthru
    _
  // Predicated region
  $region10: #{_lambda_.1} parent=0 // pred_check
    _
  $region11: #{_lambda_.1} parent=0 // pred_check_branch
    %14 = sbr.rel (0) target = $region13
  $region12: #{_lambda_.1} parent=0 // pred_region
    _
  $region13: #{_lambda_.1} parent=0 // pred_fallthru
    _
  // Predicated region
  $region14: #{_lambda_.1} parent=0 // pred_check
    _
  $region15: #{_lambda_.1} parent=0 // pred_check_branch
    %16 = sbr.rel (0) target = $region17
  $region16: #{_lambda_.1} parent=0 // pred_region
    _
  $region17: #{_lambda_.1} parent=0 // pred_fallthru
    _
  %s18 = smul.u32 0, 8
  %v19 = vlaneseq
  %v20 = vshrl.u32 %v19, 7
  %v21 = vstv %s18
  %v22 = vadd.s32 %v20, %v21
  %vm23 = vcmp.ge.s32.totalorder %v22, 4
  %v24 = vld [vmem:[%s3] sm:$0xff]
  %v25 = vlaneseq
  %v26 = vshrl.u32 %v25, 7
  %v27 = vsub.s32 2, %v26
  %v28 = vrot.slane %v24, %v27
  %v29 = vlaneseq
  %v30 = vshrl.u32 %v29, 7
  %v31 = vsub.s32 0, %v30
  %v32 = vrot.slane %v24, %v31
  %v33 = vsel %vm23, %v28, %v32
  %v34 = vlaneseq
  %v35 = vshrl.u32 %v34, 7
  %v36 = vsub.s32 3, %v35
  %v37 = vrot.slane %v24, %v36
  %v38 = vlaneseq
  %v39 = vshrl.u32 %v38, 7
  %v40 = vsub.s32 1, %v39
  %v41 = vrot.slane %v24, %v40
  %v42 = vsel %vm23, %v37, %v41
  %v43 = vld [vmem:[%s0] sm:$0xff]
  %v44 = vsub.f32 %v43, 128.0
  %v45 = vpack.c.bf16 %v44, %v44
  %v46 = vld [vmem:[%s1] sm:$0xf]
  %v47 = vld [vmem:[%s1 + $0x4] sm:$0xf]
  %v48 = vld [vmem:[%s1 + $0x8] sm:$0xf]
  %v49 = vld [vmem:[%s1 + $0xc] sm:$0xf]
  %v50 = vld [vmem:[%s1 + $0x10] sm:$0xf]
  %v51 = vld [vmem:[%s1 + $0x14] sm:$0xf]
  %v52 = vld [vmem:[%s1 + $0x18] sm:$0xf]
  %v53 = vld [vmem:[%s1 + $0x1c] sm:$0xf]
  %v54 = vld [vmem:[%s1 + $0x20] sm:$0xf]
  %v55 = vld [vmem:[%s1 + $0x24] sm:$0xf]
  %v56 = vld [vmem:[%s1 + $0x28] sm:$0xf]
  %v57 = vld [vmem:[%s1 + $0x2c] sm:$0xf]
  %v58 = vld [vmem:[%s1 + $0x30] sm:$0xf]
  %v59 = vld [vmem:[%s1 + $0x34] sm:$0xf]
  %v60 = vld [vmem:[%s1 + $0x38] sm:$0xf]
  %v61 = vld [vmem:[%s1 + $0x3c] sm:$0xf]
  %v78 = vunpack.c.l.b16 %v46
  %v79 = vunpack.c.l.b16 %v47
  %v80 = vunpack.c.l.b16 %v48
  %v81 = vunpack.c.l.b16 %v49
  %v82 = vunpack.c.l.b16 %v50
  %v83 = vunpack.c.l.b16 %v51
  %v84 = vunpack.c.l.b16 %v52
  %v85 = vunpack.c.l.b16 %v53
  %v86 = vunpack.c.l.b16 %v54
  %v87 = vunpack.c.l.b16 %v55
  %v88 = vunpack.c.l.b16 %v56
  %v89 = vunpack.c.l.b16 %v57
  %v90 = vunpack.c.l.b16 %v58
  %v91 = vunpack.c.l.b16 %v59
  %v92 = vunpack.c.l.b16 %v60
  %v93 = vunpack.c.l.b16 %v61
  %v94 = vpack.c.b16 %v79, %v78
  %v95 = vpack.c.b16 %v81, %v80
  %v96 = vpack.c.b16 %v83, %v82
  %v97 = vpack.c.b16 %v85, %v84
  %v98 = vpack.c.b16 %v87, %v86
  %v99 = vpack.c.b16 %v89, %v88
  %v100 = vpack.c.b16 %v91, %v90
  %v101 = vpack.c.b16 %v93, %v92
  %110 = vmatprep.subr.bf16.mxu0 0
  %111 = vmatpush1.bf16.msra.mxu0 %v101
  %112 = vmatprep.subr.bf16.mxu0 0
  %113 = vmatpush1.bf16.msra.mxu0 %v100
  %114 = vmatprep.subr.bf16.mxu0 0
  %115 = vmatpush1.bf16.msra.mxu0 %v99
  %116 = vmatprep.subr.bf16.mxu0 0
  %117 = vmatpush1.bf16.msra.mxu0 %v98
  %118 = vmatprep.subr.bf16.mxu0 0
  %119 = vmatpush1.bf16.msra.mxu0 %v97
  %120 = vmatprep.subr.bf16.mxu0 0
  %121 = vmatpush1.bf16.msra.mxu0 %v96
  %122 = vmatprep.subr.bf16.mxu0 0
  %123 = vmatpush1.bf16.msra.mxu0 %v95
  %124 = vmatprep.subr.bf16.mxu0 0
  %125 = vmatpush1.bf16.msra.mxu0 %v94
  %126 = vmatprep.subr.bf16.mxu0 0
  %127 = vmatpush2.bf16.msra.mxu0 0
  %128 = vmatprep.subr.bf16.mxu0 0
  %129 = vmatpush2.bf16.msra.mxu0 0
  %130 = vmatprep.subr.bf16.mxu0 0
  %131 = vmatpush2.bf16.msra.mxu0 0
  %132 = vmatprep.subr.bf16.mxu0 0
  %133 = vmatpush2.bf16.msra.mxu0 0
  %134 = vmatprep.subr.bf16.mxu0 0
  %135 = vmatpush2.bf16.msra.mxu0 0
  %136 = vmatprep.subr.bf16.mxu0 0
  %137 = vmatpush2.bf16.msra.mxu0 0
  %138 = vmatprep.subr.bf16.mxu0 0
  %139 = vmatpush2.bf16.msra.mxu0 0
  %140 = vmatprep.subr.bf16.mxu0 0
  %141 = vmatpush2.bf16.msra.mxu0 0
  %142 = vmatprep.mubr.bf16.mxu0 0
  %143 = vmatmul.mubr.bf16.gmra.mxu0 %v45
  %v144 = vpop.f32.mrf.mxu0
  %v145 = vadd.f32 0.0, %v144
  %v146 = vpop.f32.mrf.mxu0
  %v147 = vpop.f32.mrf.mxu0
  %v148 = vpop.f32.mrf.mxu0
  %149 = vdwg.mxu0
  %v150 = vmul.f32 %v145, %v33
  %v151 = vround.ne.pseudo %v150
  %v152 = vsub.f32 %v150, %v151
  %v153 = vmul.f32 %v152, %v152
  %v154 = vmul.f32 %v152, %v153
  %v155 = vadd.f32 %v151, %v154
  %v156 = vmul.f32 %v155, %v42
  %v157 = vpack.c.bf16 %v156, %v156
  %v158 = vld [vmem:[%s2] sm:$0xf]
  %v159 = vld [vmem:[%s2 + $0x4] sm:$0xf]
  %v160 = vld [vmem:[%s2 + $0x8] sm:$0xf]
  %v161 = vld [vmem:[%s2 + $0xc] sm:$0xf]
  %v162 = vld [vmem:[%s2 + $0x10] sm:$0xf]
  %v163 = vld [vmem:[%s2 + $0x14] sm:$0xf]
  %v164 = vld [vmem:[%s2 + $0x18] sm:$0xf]
  %v165 = vld [vmem:[%s2 + $0x1c] sm:$0xf]
  %v166 = vld [vmem:[%s2 + $0x20] sm:$0xf]
  %v167 = vld [vmem:[%s2 + $0x24] sm:$0xf]
  %v168 = vld [vmem:[%s2 + $0x28] sm:$0xf]
  %v169 = vld [vmem:[%s2 + $0x2c] sm:$0xf]
  %v170 = vld [vmem:[%s2 + $0x30] sm:$0xf]
  %v171 = vld [vmem:[%s2 + $0x34] sm:$0xf]
  %v172 = vld [vmem:[%s2 + $0x38] sm:$0xf]
  %v173 = vld [vmem:[%s2 + $0x3c] sm:$0xf]
  %v190 = vunpack.c.l.b16 %v158
  %v191 = vunpack.c.l.b16 %v159
  %v192 = vunpack.c.l.b16 %v160
  %v193 = vunpack.c.l.b16 %v161
  %v194 = vunpack.c.l.b16 %v162
  %v195 = vunpack.c.l.b16 %v163
  %v196 = vunpack.c.l.b16 %v164
  %v197 = vunpack.c.l.b16 %v165
  %v198 = vunpack.c.l.b16 %v166
  %v199 = vunpack.c.l.b16 %v167
  %v200 = vunpack.c.l.b16 %v168
  %v201 = vunpack.c.l.b16 %v169
  %v202 = vunpack.c.l.b16 %v170
  %v203 = vunpack.c.l.b16 %v171
  %v204 = vunpack.c.l.b16 %v172
  %v205 = vunpack.c.l.b16 %v173
  %v206 = vpack.c.b16 %v191, %v190
  %v207 = vpack.c.b16 %v193, %v192
  %v208 = vpack.c.b16 %v195, %v194
  %v209 = vpack.c.b16 %v197, %v196
  %v210 = vpack.c.b16 %v199, %v198
  %v211 = vpack.c.b16 %v201, %v200
  %v212 = vpack.c.b16 %v203, %v202
  %v213 = vpack.c.b16 %v205, %v204
  %222 = vmatprep.subr.bf16.mxu0 0
  %223 = vmatpush1.bf16.msra.mxu0 %v213
  %224 = vmatprep.subr.bf16.mxu0 0
  %225 = vmatpush1.bf16.msra.mxu0 %v212
  %226 = vmatprep.subr.bf16.mxu0 0
  %227 = vmatpush1.bf16.msra.mxu0 %v211
  %228 = vmatprep.subr.bf16.mxu0 0
  %229 = vmatpush1.bf16.msra.mxu0 %v210
  %230 = vmatprep.subr.bf16.mxu0 0
  %231 = vmatpush1.bf16.msra.mxu0 %v209
  %232 = vmatprep.subr.bf16.mxu0 0
  %233 = vmatpush1.bf16.msra.mxu0 %v208
  %234 = vmatprep.subr.bf16.mxu0 0
  %235 = vmatpush1.bf16.msra.mxu0 %v207
  %236 = vmatprep.subr.bf16.mxu0 0
  %237 = vmatpush1.bf16.msra.mxu0 %v206
  %238 = vmatprep.subr.bf16.mxu0 0
  %239 = vmatpush2.bf16.msra.mxu0 0
  %240 = vmatprep.subr.bf16.mxu0 0
  %241 = vmatpush2.bf16.msra.mxu0 0
  %242 = vmatprep.subr.bf16.mxu0 0
  %243 = vmatpush2.bf16.msra.mxu0 0
  %244 = vmatprep.subr.bf16.mxu0 0
  %245 = vmatpush2.bf16.msra.mxu0 0
  %246 = vmatprep.subr.bf16.mxu0 0
  %247 = vmatpush2.bf16.msra.mxu0 0
  %248 = vmatprep.subr.bf16.mxu0 0
  %249 = vmatpush2.bf16.msra.mxu0 0
  %250 = vmatprep.subr.bf16.mxu0 0
  %251 = vmatpush2.bf16.msra.mxu0 0
  %252 = vmatprep.subr.bf16.mxu0 0
  %253 = vmatpush2.bf16.msra.mxu0 0
  %254 = vmatprep.mubr.bf16.mxu0 0
  %255 = vmatmul.mubr.bf16.gmra.mxu0 %v157
  %v256 = vpop.f32.mrf.mxu0
  %v257 = vadd.f32 128.0, %v256
  %v258 = vpop.f32.mrf.mxu0
  %v259 = vpop.f32.mrf.mxu0
  %v260 = vpop.f32.mrf.mxu0
  %261 = vdwg.mxu0
  %262 = vst [vmem:[%s4] sm:$0xff] %v257
  // Predicated region
  $region18: #{_lambda_.1} parent=0 // pred_check
    _
  $region19: #{_lambda_.1} parent=0 // pred_check_branch
    %264 = sbr.rel (0) target = $region21
  $region20: #{_lambda_.1} parent=0 // pred_region
    _
  $region21: #{_lambda_.1} parent=0 // pred_fallthru
    _
  // Predicated region
  $region22: #{_lambda_.1} parent=0 // pred_check
    _
  $region23: #{_lambda_.1} parent=0 // pred_check_branch
    %266 = sbr.rel (0) target = $region25
  $region24: #{_lambda_.1} parent=0 // pred_region
    _
  $region25: #{_lambda_.1} parent=0 // pred_fallthru
    _

</llo_original>
